<compile_context>
chip_gen: v7x
topology: tpu7x:2x2x1
jax: 0.10.0
libtpu: 0.0.40
codegen_flags: <defaults>
</compile_context>

<pallas_src>
import jax
import jax.numpy as jnp
from jax import lax
from jax.experimental import pallas as pl
from jax.experimental.pallas import tpu as pltpu

HIDDEN = 20            # hidden width of nn.Linear(1, 20)
LANE = 128             # TPU lane width: samples live on the lane axis
CHUNK_ROWS = 64        # inner-loop chunk: (64,128) f32 = 8 vregs per operand
MIN_BLOCK_ROWS = 256   # >=128 KiB blocks: amortize ~0.35us per-grid-step overhead
MAX_BLOCK_ROWS = 4096  # 2 MiB block; 2 arrays x 2 buffers x 2 MiB = 8 MiB VMEM
TARGET_GRID_STEPS = 8  # enough steps for DMA/compute overlap + v7x megacore


def _pick_block_rows(rows: int) -> int:
    """Pick block rows: a CHUNK_ROWS multiple aiming for ~TARGET_GRID_STEPS steps."""
    if rows < CHUNK_ROWS:
        return rows                                # one tiny block (== array dim)
    max_tr = (rows // CHUNK_ROWS) * CHUNK_ROWS     # largest chunk multiple <= rows
    tr = pl.cdiv(rows, TARGET_GRID_STEPS)
    tr = pl.cdiv(tr, CHUNK_ROWS) * CHUNK_ROWS
    tr = max(MIN_BLOCK_ROWS, tr)
    return min(tr, MAX_BLOCK_ROWS, max_tr)


def _make_kernel(block_rows: int):
    chunk = min(CHUNK_ROWS, block_rows)
    n_chunks = block_rows // chunk                 # exact by construction

    def kernel(params_ref, x_ref, o_ref):
        # params_ref: (3*HIDDEN+1,) f32 in SMEM = [w1(20) | b1(20) | w2(20) | b2]
        # x_ref / o_ref: (block_rows, 128) f32 VMEM tiles, samples on lanes.
        #
        # Hoist all 61 scalar SMEM loads out of the chunk loop: issued once per
        # grid step; Mosaic fuses the splats as vector-scalar operands (no
        # pre-broadcast vregs).
        w1 = [params_ref[j] for j in range(HIDDEN)]
        b1 = [params_ref[HIDDEN + j] for j in range(HIDDEN)]
        w2 = [params_ref[2 * HIDDEN + j] for j in range(HIDDEN)]
        b2 = params_ref[3 * HIDDEN]

        def mlp(x):
            # Fully unrolled 20-unit VPU accumulation.
            # TODO(synk): optional ~20% VALU saving by folding w2 into layer 1
            # (a_j=w2_j*w1_j, c_j=w2_j*b1_j) + host-side sign split of hidden
            # units; needs concrete weight values, so not done here.
            acc = w2[0] * jnp.maximum(x * w1[0] + b1[0], 0.0)
            for j in range(1, HIDDEN):
                acc = acc + w2[j] * jnp.maximum(x * w1[j] + b1[j], 0.0)
            return acc + b2

        if n_chunks == 1:
            o_ref[...] = mlp(x_ref[...]).astype(o_ref.dtype)
        else:
            # Walk the block in 8-vreg row chunks so the 20-step chain stays
            # vreg-resident (fusing the whole block overflowed the vreg file).
            def body(c, carry):
                r0 = pl.multiple_of(c * chunk, chunk)
                x = x_ref[pl.ds(r0, chunk), :]
                o_ref[pl.ds(r0, chunk), :] = mlp(x).astype(o_ref.dtype)
                return carry

            lax.fori_loop(0, n_chunks, body, 0)

    return kernel


def maximum_likelihood_forward(x, w1, b1, w2, b2):
    """Forward of nn.Sequential(Linear(1,20), ReLU(), Linear(20,1)).

    x: (N,1); w1: (20,1); b1: (20,); w2: (1,20); b2: (1,). Returns (N,1).
    """
    n = x.shape[0]
    out_dtype = x.dtype

    # Lane-dense view of the samples. Free (bitcast) when N % 128 == 0; ragged
    # N pays one pad pass here and one tail-slice pass on the output.
    xf = x.reshape(-1).astype(jnp.float32)
    rows = pl.cdiv(n, LANE)
    n_pad = rows * LANE
    if n_pad != n:
        xf = jnp.pad(xf, (0, n_pad - n))
    x2d = xf.reshape(rows, LANE)

    tr = _pick_block_rows(rows)
    num_blocks = pl.cdiv(rows, tr)   # last block may be partial: Pallas pads
                                     # the reads and masks the stores.

    # Pack all 61 parameters into one SMEM-prefetched vector (replaces four
    # tiny (20,1)/(20,)/(1,20)/(1,) VMEM input pipelines).
    params = jnp.concatenate(
        [w1.reshape(-1), b1.reshape(-1), w2.reshape(-1), b2.reshape(-1)]
    ).astype(jnp.float32)            # (61,)

    out2d = pl.pallas_call(
        _make_kernel(tr),
        out_shape=jax.ShapeDtypeStruct((rows, LANE), jnp.float32),
        grid_spec=pltpu.PrefetchScalarGridSpec(
            num_scalar_prefetch=1,
            grid=(num_blocks,),
            in_specs=[pl.BlockSpec((tr, LANE), lambda i, p: (i, 0))],
            out_specs=pl.BlockSpec((tr, LANE), lambda i, p: (i, 0)),
        ),
        compiler_params=pltpu.CompilerParams(
            dimension_semantics=("parallel",),  # shard grid steps across TCs
        ),
    )(params, x2d)

    out = out2d.reshape(-1)
    if n_pad != n:
        out = out[:n]
    return out.reshape(n, 1).astype(out_dtype)


def _init_params(key):
    """Deterministic init mimicking PyTorch Linear default U(-1/sqrt(fan_in), +)."""
    k1, k2, k3, k4 = jax.random.split(key, 4)
    bound1 = 1.0                      # fan_in = 1
    bound2 = 1.0 / jnp.sqrt(20.0)     # fan_in = 20
    w1 = jax.random.uniform(k1, (HIDDEN, 1), jnp.float32, -bound1, bound1)
    b1 = jax.random.uniform(k2, (HIDDEN,), jnp.float32, -bound1, bound1)
    w2 = jax.random.uniform(k3, (1, HIDDEN), jnp.float32, -bound2, bound2)
    b2 = jax.random.uniform(k4, (1,), jnp.float32, -bound2, bound2)
    return w1, b1, w2, b2


def _reference(x, w1, b1, w2, b2):
    return jnp.maximum(x @ w1.T + b1, 0.0) @ w2.T + b2


if __name__ == "__main__":
    key = jax.random.PRNGKey(0)
    kp, kx1, kx2, kx3 = jax.random.split(key, 4)
    w1, b1, w2, b2 = _init_params(kp)

    # Three cases:
    #   N=8     : tiny (1,128) single block, straight-line kernel path
    #   N=65536 : aligned (N%128==0, copy-free relayout), multi-step grid,
    #             4-iteration in-kernel chunk loop
    #   N=10000 : ragged N, partial last grid block
    for n, kx in ((8, kx1), (65536, kx2), (10000, kx3)):
        x = jax.random.normal(kx, (n, 1), jnp.float32)
        out = jax.block_until_ready(maximum_likelihood_forward(x, w1, b1, w2, b2))
        ref = _reference(x, w1, b1, w2, b2)
        assert out.shape == (n, 1)
        assert jnp.allclose(out, ref, atol=1e-5, rtol=1e-5), f"mismatch at N={n}"

    print("KERNEL_OK")
</pallas_src>

<mosaic_0001>
module attributes {stable_mosaic.version = 11 : i64} {
  func.func @kernel(%arg0: i32, %arg1: memref<61xf32, #tpu.memory_space<smem>>, %arg2: memref<1x128xf32, #tpu.memory_space<vmem>>, %arg3: memref<1x128xf32, #tpu.memory_space<vmem>>) attributes {dimension_semantics = [#tpu.dimension_semantics<parallel>], iteration_bounds = array<i64: 1>, scalar_prefetch = 1 : i64, scratch_operands = 0 : i64, tpu.core_type = #tpu.core_type<tc>, window_params = [{transform_indices = @transform_0, window_bounds = array<i64: 1, 128>}, {transform_indices = @transform_1, window_bounds = array<i64: 1, 128>}]} {
    %c0 = arith.constant 0 : index
    %0 = memref.load %arg1[%c0] : memref<61xf32, #tpu.memory_space<smem>>
    %c1 = arith.constant 1 : index
    %1 = memref.load %arg1[%c1] : memref<61xf32, #tpu.memory_space<smem>>
    %c2 = arith.constant 2 : index
    %2 = memref.load %arg1[%c2] : memref<61xf32, #tpu.memory_space<smem>>
    %c3 = arith.constant 3 : index
    %3 = memref.load %arg1[%c3] : memref<61xf32, #tpu.memory_space<smem>>
    %c4 = arith.constant 4 : index
    %4 = memref.load %arg1[%c4] : memref<61xf32, #tpu.memory_space<smem>>
    %c5 = arith.constant 5 : index
    %5 = memref.load %arg1[%c5] : memref<61xf32, #tpu.memory_space<smem>>
    %c6 = arith.constant 6 : index
    %6 = memref.load %arg1[%c6] : memref<61xf32, #tpu.memory_space<smem>>
    %c7 = arith.constant 7 : index
    %7 = memref.load %arg1[%c7] : memref<61xf32, #tpu.memory_space<smem>>
    %c8 = arith.constant 8 : index
    %8 = memref.load %arg1[%c8] : memref<61xf32, #tpu.memory_space<smem>>
    %c9 = arith.constant 9 : index
    %9 = memref.load %arg1[%c9] : memref<61xf32, #tpu.memory_space<smem>>
    %c10 = arith.constant 10 : index
    %10 = memref.load %arg1[%c10] : memref<61xf32, #tpu.memory_space<smem>>
    %c11 = arith.constant 11 : index
    %11 = memref.load %arg1[%c11] : memref<61xf32, #tpu.memory_space<smem>>
    %c12 = arith.constant 12 : index
    %12 = memref.load %arg1[%c12] : memref<61xf32, #tpu.memory_space<smem>>
    %c13 = arith.constant 13 : index
    %13 = memref.load %arg1[%c13] : memref<61xf32, #tpu.memory_space<smem>>
    %c14 = arith.constant 14 : index
    %14 = memref.load %arg1[%c14] : memref<61xf32, #tpu.memory_space<smem>>
    %c15 = arith.constant 15 : index
    %15 = memref.load %arg1[%c15] : memref<61xf32, #tpu.memory_space<smem>>
    %c16 = arith.constant 16 : index
    %16 = memref.load %arg1[%c16] : memref<61xf32, #tpu.memory_space<smem>>
    %c17 = arith.constant 17 : index
    %17 = memref.load %arg1[%c17] : memref<61xf32, #tpu.memory_space<smem>>
    %c18 = arith.constant 18 : index
    %18 = memref.load %arg1[%c18] : memref<61xf32, #tpu.memory_space<smem>>
    %c19 = arith.constant 19 : index
    %19 = memref.load %arg1[%c19] : memref<61xf32, #tpu.memory_space<smem>>
    %c20 = arith.constant 20 : index
    %20 = memref.load %arg1[%c20] : memref<61xf32, #tpu.memory_space<smem>>
    %c21 = arith.constant 21 : index
    %21 = memref.load %arg1[%c21] : memref<61xf32, #tpu.memory_space<smem>>
    %c22 = arith.constant 22 : index
    %22 = memref.load %arg1[%c22] : memref<61xf32, #tpu.memory_space<smem>>
    %c23 = arith.constant 23 : index
    %23 = memref.load %arg1[%c23] : memref<61xf32, #tpu.memory_space<smem>>
    %c24 = arith.constant 24 : index
    %24 = memref.load %arg1[%c24] : memref<61xf32, #tpu.memory_space<smem>>
    %c25 = arith.constant 25 : index
    %25 = memref.load %arg1[%c25] : memref<61xf32, #tpu.memory_space<smem>>
    %c26 = arith.constant 26 : index
    %26 = memref.load %arg1[%c26] : memref<61xf32, #tpu.memory_space<smem>>
    %c27 = arith.constant 27 : index
    %27 = memref.load %arg1[%c27] : memref<61xf32, #tpu.memory_space<smem>>
    %c28 = arith.constant 28 : index
    %28 = memref.load %arg1[%c28] : memref<61xf32, #tpu.memory_space<smem>>
    %c29 = arith.constant 29 : index
    %29 = memref.load %arg1[%c29] : memref<61xf32, #tpu.memory_space<smem>>
    %c30 = arith.constant 30 : index
    %30 = memref.load %arg1[%c30] : memref<61xf32, #tpu.memory_space<smem>>
    %c31 = arith.constant 31 : index
    %31 = memref.load %arg1[%c31] : memref<61xf32, #tpu.memory_space<smem>>
    %c32 = arith.constant 32 : index
    %32 = memref.load %arg1[%c32] : memref<61xf32, #tpu.memory_space<smem>>
    %c33 = arith.constant 33 : index
    %33 = memref.load %arg1[%c33] : memref<61xf32, #tpu.memory_space<smem>>
    %c34 = arith.constant 34 : index
    %34 = memref.load %arg1[%c34] : memref<61xf32, #tpu.memory_space<smem>>
    %c35 = arith.constant 35 : index
    %35 = memref.load %arg1[%c35] : memref<61xf32, #tpu.memory_space<smem>>
    %c36 = arith.constant 36 : index
    %36 = memref.load %arg1[%c36] : memref<61xf32, #tpu.memory_space<smem>>
    %c37 = arith.constant 37 : index
    %37 = memref.load %arg1[%c37] : memref<61xf32, #tpu.memory_space<smem>>
    %c38 = arith.constant 38 : index
    %38 = memref.load %arg1[%c38] : memref<61xf32, #tpu.memory_space<smem>>
    %c39 = arith.constant 39 : index
    %39 = memref.load %arg1[%c39] : memref<61xf32, #tpu.memory_space<smem>>
    %c40 = arith.constant 40 : index
    %40 = memref.load %arg1[%c40] : memref<61xf32, #tpu.memory_space<smem>>
    %c41 = arith.constant 41 : index
    %41 = memref.load %arg1[%c41] : memref<61xf32, #tpu.memory_space<smem>>
    %c42 = arith.constant 42 : index
    %42 = memref.load %arg1[%c42] : memref<61xf32, #tpu.memory_space<smem>>
    %c43 = arith.constant 43 : index
    %43 = memref.load %arg1[%c43] : memref<61xf32, #tpu.memory_space<smem>>
    %c44 = arith.constant 44 : index
    %44 = memref.load %arg1[%c44] : memref<61xf32, #tpu.memory_space<smem>>
    %c45 = arith.constant 45 : index
    %45 = memref.load %arg1[%c45] : memref<61xf32, #tpu.memory_space<smem>>
    %c46 = arith.constant 46 : index
    %46 = memref.load %arg1[%c46] : memref<61xf32, #tpu.memory_space<smem>>
    %c47 = arith.constant 47 : index
    %47 = memref.load %arg1[%c47] : memref<61xf32, #tpu.memory_space<smem>>
    %c48 = arith.constant 48 : index
    %48 = memref.load %arg1[%c48] : memref<61xf32, #tpu.memory_space<smem>>
    %c49 = arith.constant 49 : index
    %49 = memref.load %arg1[%c49] : memref<61xf32, #tpu.memory_space<smem>>
    %c50 = arith.constant 50 : index
    %50 = memref.load %arg1[%c50] : memref<61xf32, #tpu.memory_space<smem>>
    %c51 = arith.constant 51 : index
    %51 = memref.load %arg1[%c51] : memref<61xf32, #tpu.memory_space<smem>>
    %c52 = arith.constant 52 : index
    %52 = memref.load %arg1[%c52] : memref<61xf32, #tpu.memory_space<smem>>
    %c53 = arith.constant 53 : index
    %53 = memref.load %arg1[%c53] : memref<61xf32, #tpu.memory_space<smem>>
    %c54 = arith.constant 54 : index
    %54 = memref.load %arg1[%c54] : memref<61xf32, #tpu.memory_space<smem>>
    %c55 = arith.constant 55 : index
    %55 = memref.load %arg1[%c55] : memref<61xf32, #tpu.memory_space<smem>>
    %c56 = arith.constant 56 : index
    %56 = memref.load %arg1[%c56] : memref<61xf32, #tpu.memory_space<smem>>
    %c57 = arith.constant 57 : index
    %57 = memref.load %arg1[%c57] : memref<61xf32, #tpu.memory_space<smem>>
    %c58 = arith.constant 58 : index
    %58 = memref.load %arg1[%c58] : memref<61xf32, #tpu.memory_space<smem>>
    %c59 = arith.constant 59 : index
    %59 = memref.load %arg1[%c59] : memref<61xf32, #tpu.memory_space<smem>>
    %c60 = arith.constant 60 : index
    %60 = memref.load %arg1[%c60] : memref<61xf32, #tpu.memory_space<smem>>
    %c0_0 = arith.constant 0 : index
    %c0_1 = arith.constant 0 : index
    %61 = vector.load %arg2[%c0_0, %c0_1] : memref<1x128xf32, #tpu.memory_space<vmem>>, vector<1x128xf32>
    %62 = vector.broadcast %0 : f32 to vector<1x128xf32>
    %63 = arith.mulf %61, %62 : vector<1x128xf32>
    %64 = vector.broadcast %20 : f32 to vector<1x128xf32>
    %65 = arith.addf %63, %64 : vector<1x128xf32>
    %cst = arith.constant 0.000000e+00 : f32
    %66 = vector.broadcast %cst : f32 to vector<1x128xf32>
    %67 = arith.maximumf %65, %66 : vector<1x128xf32>
    %68 = vector.broadcast %40 : f32 to vector<1x128xf32>
    %69 = arith.mulf %68, %67 : vector<1x128xf32>
    %70 = vector.broadcast %1 : f32 to vector<1x128xf32>
    %71 = arith.mulf %61, %70 : vector<1x128xf32>
    %72 = vector.broadcast %21 : f32 to vector<1x128xf32>
    %73 = arith.addf %71, %72 : vector<1x128xf32>
    %cst_2 = arith.constant 0.000000e+00 : f32
    %74 = vector.broadcast %cst_2 : f32 to vector<1x128xf32>
    %75 = arith.maximumf %73, %74 : vector<1x128xf32>
    %76 = vector.broadcast %41 : f32 to vector<1x128xf32>
    %77 = arith.mulf %76, %75 : vector<1x128xf32>
    %78 = arith.addf %69, %77 : vector<1x128xf32>
    %79 = vector.broadcast %2 : f32 to vector<1x128xf32>
    %80 = arith.mulf %61, %79 : vector<1x128xf32>
    %81 = vector.broadcast %22 : f32 to vector<1x128xf32>
    %82 = arith.addf %80, %81 : vector<1x128xf32>
    %cst_3 = arith.constant 0.000000e+00 : f32
    %83 = vector.broadcast %cst_3 : f32 to vector<1x128xf32>
    %84 = arith.maximumf %82, %83 : vector<1x128xf32>
    %85 = vector.broadcast %42 : f32 to vector<1x128xf32>
    %86 = arith.mulf %85, %84 : vector<1x128xf32>
    %87 = arith.addf %78, %86 : vector<1x128xf32>
    %88 = vector.broadcast %3 : f32 to vector<1x128xf32>
    %89 = arith.mulf %61, %88 : vector<1x128xf32>
    %90 = vector.broadcast %23 : f32 to vector<1x128xf32>
    %91 = arith.addf %89, %90 : vector<1x128xf32>
    %cst_4 = arith.constant 0.000000e+00 : f32
    %92 = vector.broadcast %cst_4 : f32 to vector<1x128xf32>
    %93 = arith.maximumf %91, %92 : vector<1x128xf32>
    %94 = vector.broadcast %43 : f32 to vector<1x128xf32>
    %95 = arith.mulf %94, %93 : vector<1x128xf32>
    %96 = arith.addf %87, %95 : vector<1x128xf32>
    %97 = vector.broadcast %4 : f32 to vector<1x128xf32>
    %98 = arith.mulf %61, %97 : vector<1x128xf32>
    %99 = vector.broadcast %24 : f32 to vector<1x128xf32>
    %100 = arith.addf %98, %99 : vector<1x128xf32>
    %cst_5 = arith.constant 0.000000e+00 : f32
    %101 = vector.broadcast %cst_5 : f32 to vector<1x128xf32>
    %102 = arith.maximumf %100, %101 : vector<1x128xf32>
    %103 = vector.broadcast %44 : f32 to vector<1x128xf32>
    %104 = arith.mulf %103, %102 : vector<1x128xf32>
    %105 = arith.addf %96, %104 : vector<1x128xf32>
    %106 = vector.broadcast %5 : f32 to vector<1x128xf32>
    %107 = arith.mulf %61, %106 : vector<1x128xf32>
    %108 = vector.broadcast %25 : f32 to vector<1x128xf32>
    %109 = arith.addf %107, %108 : vector<1x128xf32>
    %cst_6 = arith.constant 0.000000e+00 : f32
    %110 = vector.broadcast %cst_6 : f32 to vector<1x128xf32>
    %111 = arith.maximumf %109, %110 : vector<1x128xf32>
    %112 = vector.broadcast %45 : f32 to vector<1x128xf32>
    %113 = arith.mulf %112, %111 : vector<1x128xf32>
    %114 = arith.addf %105, %113 : vector<1x128xf32>
    %115 = vector.broadcast %6 : f32 to vector<1x128xf32>
    %116 = arith.mulf %61, %115 : vector<1x128xf32>
    %117 = vector.broadcast %26 : f32 to vector<1x128xf32>
    %118 = arith.addf %116, %117 : vector<1x128xf32>
    %cst_7 = arith.constant 0.000000e+00 : f32
    %119 = vector.broadcast %cst_7 : f32 to vector<1x128xf32>
    %120 = arith.maximumf %118, %119 : vector<1x128xf32>
    %121 = vector.broadcast %46 : f32 to vector<1x128xf32>
    %122 = arith.mulf %121, %120 : vector<1x128xf32>
    %123 = arith.addf %114, %122 : vector<1x128xf32>
    %124 = vector.broadcast %7 : f32 to vector<1x128xf32>
    %125 = arith.mulf %61, %124 : vector<1x128xf32>
    %126 = vector.broadcast %27 : f32 to vector<1x128xf32>
    %127 = arith.addf %125, %126 : vector<1x128xf32>
    %cst_8 = arith.constant 0.000000e+00 : f32
    %128 = vector.broadcast %cst_8 : f32 to vector<1x128xf32>
    %129 = arith.maximumf %127, %128 : vector<1x128xf32>
    %130 = vector.broadcast %47 : f32 to vector<1x128xf32>
    %131 = arith.mulf %130, %129 : vector<1x128xf32>
    %132 = arith.addf %123, %131 : vector<1x128xf32>
    %133 = vector.broadcast %8 : f32 to vector<1x128xf32>
    %134 = arith.mulf %61, %133 : vector<1x128xf32>
    %135 = vector.broadcast %28 : f32 to vector<1x128xf32>
    %136 = arith.addf %134, %135 : vector<1x128xf32>
    %cst_9 = arith.constant 0.000000e+00 : f32
    %137 = vector.broadcast %cst_9 : f32 to vector<1x128xf32>
    %138 = arith.maximumf %136, %137 : vector<1x128xf32>
    %139 = vector.broadcast %48 : f32 to vector<1x128xf32>
    %140 = arith.mulf %139, %138 : vector<1x128xf32>
    %141 = arith.addf %132, %140 : vector<1x128xf32>
    %142 = vector.broadcast %9 : f32 to vector<1x128xf32>
    %143 = arith.mulf %61, %142 : vector<1x128xf32>
    %144 = vector.broadcast %29 : f32 to vector<1x128xf32>
    %145 = arith.addf %143, %144 : vector<1x128xf32>
    %cst_10 = arith.constant 0.000000e+00 : f32
    %146 = vector.broadcast %cst_10 : f32 to vector<1x128xf32>
    %147 = arith.maximumf %145, %146 : vector<1x128xf32>
    %148 = vector.broadcast %49 : f32 to vector<1x128xf32>
    %149 = arith.mulf %148, %147 : vector<1x128xf32>
    %150 = arith.addf %141, %149 : vector<1x128xf32>
    %151 = vector.broadcast %10 : f32 to vector<1x128xf32>
    %152 = arith.mulf %61, %151 : vector<1x128xf32>
    %153 = vector.broadcast %30 : f32 to vector<1x128xf32>
    %154 = arith.addf %152, %153 : vector<1x128xf32>
    %cst_11 = arith.constant 0.000000e+00 : f32
    %155 = vector.broadcast %cst_11 : f32 to vector<1x128xf32>
    %156 = arith.maximumf %154, %155 : vector<1x128xf32>
    %157 = vector.broadcast %50 : f32 to vector<1x128xf32>
    %158 = arith.mulf %157, %156 : vector<1x128xf32>
    %159 = arith.addf %150, %158 : vector<1x128xf32>
    %160 = vector.broadcast %11 : f32 to vector<1x128xf32>
    %161 = arith.mulf %61, %160 : vector<1x128xf32>
    %162 = vector.broadcast %31 : f32 to vector<1x128xf32>
    %163 = arith.addf %161, %162 : vector<1x128xf32>
    %cst_12 = arith.constant 0.000000e+00 : f32
    %164 = vector.broadcast %cst_12 : f32 to vector<1x128xf32>
    %165 = arith.maximumf %163, %164 : vector<1x128xf32>
    %166 = vector.broadcast %51 : f32 to vector<1x128xf32>
    %167 = arith.mulf %166, %165 : vector<1x128xf32>
    %168 = arith.addf %159, %167 : vector<1x128xf32>
    %169 = vector.broadcast %12 : f32 to vector<1x128xf32>
    %170 = arith.mulf %61, %169 : vector<1x128xf32>
    %171 = vector.broadcast %32 : f32 to vector<1x128xf32>
    %172 = arith.addf %170, %171 : vector<1x128xf32>
    %cst_13 = arith.constant 0.000000e+00 : f32
    %173 = vector.broadcast %cst_13 : f32 to vector<1x128xf32>
    %174 = arith.maximumf %172, %173 : vector<1x128xf32>
    %175 = vector.broadcast %52 : f32 to vector<1x128xf32>
    %176 = arith.mulf %175, %174 : vector<1x128xf32>
    %177 = arith.addf %168, %176 : vector<1x128xf32>
    %178 = vector.broadcast %13 : f32 to vector<1x128xf32>
    %179 = arith.mulf %61, %178 : vector<1x128xf32>
    %180 = vector.broadcast %33 : f32 to vector<1x128xf32>
    %181 = arith.addf %179, %180 : vector<1x128xf32>
    %cst_14 = arith.constant 0.000000e+00 : f32
    %182 = vector.broadcast %cst_14 : f32 to vector<1x128xf32>
    %183 = arith.maximumf %181, %182 : vector<1x128xf32>
    %184 = vector.broadcast %53 : f32 to vector<1x128xf32>
    %185 = arith.mulf %184, %183 : vector<1x128xf32>
    %186 = arith.addf %177, %185 : vector<1x128xf32>
    %187 = vector.broadcast %14 : f32 to vector<1x128xf32>
    %188 = arith.mulf %61, %187 : vector<1x128xf32>
    %189 = vector.broadcast %34 : f32 to vector<1x128xf32>
    %190 = arith.addf %188, %189 : vector<1x128xf32>
    %cst_15 = arith.constant 0.000000e+00 : f32
    %191 = vector.broadcast %cst_15 : f32 to vector<1x128xf32>
    %192 = arith.maximumf %190, %191 : vector<1x128xf32>
    %193 = vector.broadcast %54 : f32 to vector<1x128xf32>
    %194 = arith.mulf %193, %192 : vector<1x128xf32>
    %195 = arith.addf %186, %194 : vector<1x128xf32>
    %196 = vector.broadcast %15 : f32 to vector<1x128xf32>
    %197 = arith.mulf %61, %196 : vector<1x128xf32>
    %198 = vector.broadcast %35 : f32 to vector<1x128xf32>
    %199 = arith.addf %197, %198 : vector<1x128xf32>
    %cst_16 = arith.constant 0.000000e+00 : f32
    %200 = vector.broadcast %cst_16 : f32 to vector<1x128xf32>
    %201 = arith.maximumf %199, %200 : vector<1x128xf32>
    %202 = vector.broadcast %55 : f32 to vector<1x128xf32>
    %203 = arith.mulf %202, %201 : vector<1x128xf32>
    %204 = arith.addf %195, %203 : vector<1x128xf32>
    %205 = vector.broadcast %16 : f32 to vector<1x128xf32>
    %206 = arith.mulf %61, %205 : vector<1x128xf32>
    %207 = vector.broadcast %36 : f32 to vector<1x128xf32>
    %208 = arith.addf %206, %207 : vector<1x128xf32>
    %cst_17 = arith.constant 0.000000e+00 : f32
    %209 = vector.broadcast %cst_17 : f32 to vector<1x128xf32>
    %210 = arith.maximumf %208, %209 : vector<1x128xf32>
    %211 = vector.broadcast %56 : f32 to vector<1x128xf32>
    %212 = arith.mulf %211, %210 : vector<1x128xf32>
    %213 = arith.addf %204, %212 : vector<1x128xf32>
    %214 = vector.broadcast %17 : f32 to vector<1x128xf32>
    %215 = arith.mulf %61, %214 : vector<1x128xf32>
    %216 = vector.broadcast %37 : f32 to vector<1x128xf32>
    %217 = arith.addf %215, %216 : vector<1x128xf32>
    %cst_18 = arith.constant 0.000000e+00 : f32
    %218 = vector.broadcast %cst_18 : f32 to vector<1x128xf32>
    %219 = arith.maximumf %217, %218 : vector<1x128xf32>
    %220 = vector.broadcast %57 : f32 to vector<1x128xf32>
    %221 = arith.mulf %220, %219 : vector<1x128xf32>
    %222 = arith.addf %213, %221 : vector<1x128xf32>
    %223 = vector.broadcast %18 : f32 to vector<1x128xf32>
    %224 = arith.mulf %61, %223 : vector<1x128xf32>
    %225 = vector.broadcast %38 : f32 to vector<1x128xf32>
    %226 = arith.addf %224, %225 : vector<1x128xf32>
    %cst_19 = arith.constant 0.000000e+00 : f32
    %227 = vector.broadcast %cst_19 : f32 to vector<1x128xf32>
    %228 = arith.maximumf %226, %227 : vector<1x128xf32>
    %229 = vector.broadcast %58 : f32 to vector<1x128xf32>
    %230 = arith.mulf %229, %228 : vector<1x128xf32>
    %231 = arith.addf %222, %230 : vector<1x128xf32>
    %232 = vector.broadcast %19 : f32 to vector<1x128xf32>
    %233 = arith.mulf %61, %232 : vector<1x128xf32>
    %234 = vector.broadcast %39 : f32 to vector<1x128xf32>
    %235 = arith.addf %233, %234 : vector<1x128xf32>
    %cst_20 = arith.constant 0.000000e+00 : f32
    %236 = vector.broadcast %cst_20 : f32 to vector<1x128xf32>
    %237 = arith.maximumf %235, %236 : vector<1x128xf32>
    %238 = vector.broadcast %59 : f32 to vector<1x128xf32>
    %239 = arith.mulf %238, %237 : vector<1x128xf32>
    %240 = arith.addf %231, %239 : vector<1x128xf32>
    %241 = vector.broadcast %60 : f32 to vector<1x128xf32>
    %242 = arith.addf %240, %241 : vector<1x128xf32>
    %c0_21 = arith.constant 0 : index
    %c0_22 = arith.constant 0 : index
    %243 = vector.load %arg3[%c0_21, %c0_22] : memref<1x128xf32, #tpu.memory_space<vmem>>, vector<1x128xf32>
    tpu.vector_store %arg3[%c0_21, %c0_22], %242 {strides = array<i32>} : memref<1x128xf32, #tpu.memory_space<vmem>>, vector<1x128xf32>,
    return
  }
  func.func @transform_0(%arg0: i32, %arg1: memref<61xf32, #tpu.memory_space<smem>>) -> (i32, i32) {
    %c0_i32 = arith.constant 0 : i32
    %c0_i32_0 = arith.constant 0 : i32
    return %arg0, %c0_i32 : i32, i32
  }
  func.func @transform_1(%arg0: i32, %arg1: memref<61xf32, #tpu.memory_space<smem>>) -> (i32, i32) {
    %c0_i32 = arith.constant 0 : i32
    %c0_i32_0 = arith.constant 0 : i32
    return %arg0, %c0_i32 : i32, i32
  }
}

</mosaic_0001>

<llo_original>
// kernel: tpu_custom_call.1
$region0: #{tpu_custom_call.1}
  #allocation0 [shape = 'u32[]', space=smem, size = 0x4, offset = 0x4, fixed_abs, tag = 'smem constant byte address 0x4 - core index']
  #allocation1 [shape = 'u32[144,128]{1,0:T(1,128)}', space=vmem, size = 0x12000, scoped, tag = 'internal scratch']
  #allocation2 [shape = 's32[1]{0}', space=sflag, size = 0x4, scoped, tag = 'scoped memory for tpu_custom_call.1']
  #allocation3 [shape = 'u8[512]{0}', space=smem, size = 0x200, scoped, tag = 'prefetched SMEM operand 0']
  %s0 = inlined_call_operand.hbm [shape: f32[61], index: 0, kind: input, shape index: {}]
  %s1 = inlined_call_operand.vmem [shape: f32[1,128], index: 1, kind: input, shape index: {}]
  %s2 = inlined_call_operand.hbm [shape: f32[1,128], index: 2, kind: output, shape index: {}]
  %s3 = sld [smem:[#allocation0]]
  $region14: #{tpu_custom_call.1} parent=0
    _
  %s5 = ssub.s32 1, %s3
  %s6 = scalar_select 0, %s5, %s3
  %8 = dma.hbm_to_smem %s0, 16, [#allocation3], [#allocation2]
  %9 = dma.done [#allocation2], 16
  %10 = sfence
  $region1: #{tpu_custom_call.1} parent=0
    #allocation4 [shape = 'u8[512]{0}', space=vmem, size = 0x400, scoped, tag = 'output window, operand 0, single buffered']
    #allocation5 [shape = 's32[1]{0}', space=sflag, size = 0x4, scoped, tag = 'scoped memory for tpu_custom_call.1']
    %11 = vsyncpa [#allocation5], 0
    // Predicated region
    $region2: #{tpu_custom_call.1} parent=1 // pred_check
      _
    $region3: #{tpu_custom_call.1} parent=1 // pred_check_branch
      %13 = sbr.rel (0) target = $region5
    $region4: #{tpu_custom_call.1} parent=1 // pred_region
      _
    $region5: #{tpu_custom_call.1} parent=1 // pred_fallthru
      _
    %s14 = sld [smem:[#allocation3]]
    %s15 = sld [smem:[#allocation3 + $0x1]]
    %s16 = sld [smem:[#allocation3 + $0x2]]
    %s17 = sld [smem:[#allocation3 + $0x3]]
    %s18 = sld [smem:[#allocation3 + $0x4]]
    %s19 = sld [smem:[#allocation3 + $0x5]]
    %s20 = sld [smem:[#allocation3 + $0x6]]
    %s21 = sld [smem:[#allocation3 + $0x7]]
    %s22 = sld [smem:[#allocation3 + $0x8]]
    %s23 = sld [smem:[#allocation3 + $0x9]]
    %s24 = sld [smem:[#allocation3 + $0xa]]
    %s25 = sld [smem:[#allocation3 + $0xb]]
    %s26 = sld [smem:[#allocation3 + $0xc]]
    %s27 = sld [smem:[#allocation3 + $0xd]]
    %s28 = sld [smem:[#allocation3 + $0xe]]
    %s29 = sld [smem:[#allocation3 + $0xf]]
    %s30 = sld [smem:[#allocation3 + $0x10]]
    %s31 = sld [smem:[#allocation3 + $0x11]]
    %s32 = sld [smem:[#allocation3 + $0x12]]
    %s33 = sld [smem:[#allocation3 + $0x13]]
    %s34 = sld [smem:[#allocation3 + $0x14]]
    %s35 = sld [smem:[#allocation3 + $0x15]]
    %s36 = sld [smem:[#allocation3 + $0x16]]
    %s37 = sld [smem:[#allocation3 + $0x17]]
    %s38 = sld [smem:[#allocation3 + $0x18]]
    %s39 = sld [smem:[#allocation3 + $0x19]]
    %s40 = sld [smem:[#allocation3 + $0x1a]]
    %s41 = sld [smem:[#allocation3 + $0x1b]]
    %s42 = sld [smem:[#allocation3 + $0x1c]]
    %s43 = sld [smem:[#allocation3 + $0x1d]]
    %s44 = sld [smem:[#allocation3 + $0x1e]]
    %s45 = sld [smem:[#allocation3 + $0x1f]]
    %s46 = sld [smem:[#allocation3 + $0x20]]
    %s47 = sld [smem:[#allocation3 + $0x21]]
    %s48 = sld [smem:[#allocation3 + $0x22]]
    %s49 = sld [smem:[#allocation3 + $0x23]]
    %s50 = sld [smem:[#allocation3 + $0x24]]
    %s51 = sld [smem:[#allocation3 + $0x25]]
    %s52 = sld [smem:[#allocation3 + $0x26]]
    %s53 = sld [smem:[#allocation3 + $0x27]]
    %s54 = sld [smem:[#allocation3 + $0x28]]
    %s55 = sld [smem:[#allocation3 + $0x29]]
    %s56 = sld [smem:[#allocation3 + $0x2a]]
    %s57 = sld [smem:[#allocation3 + $0x2b]]
    %s58 = sld [smem:[#allocation3 + $0x2c]]
    %s59 = sld [smem:[#allocation3 + $0x2d]]
    %s60 = sld [smem:[#allocation3 + $0x2e]]
    %s61 = sld [smem:[#allocation3 + $0x2f]]
    %s62 = sld [smem:[#allocation3 + $0x30]]
    %s63 = sld [smem:[#allocation3 + $0x31]]
    %s64 = sld [smem:[#allocation3 + $0x32]]
    %s65 = sld [smem:[#allocation3 + $0x33]]
    %s66 = sld [smem:[#allocation3 + $0x34]]
    %s67 = sld [smem:[#allocation3 + $0x35]]
    %s68 = sld [smem:[#allocation3 + $0x36]]
    %s69 = sld [smem:[#allocation3 + $0x37]]
    %s70 = sld [smem:[#allocation3 + $0x38]]
    %s71 = sld [smem:[#allocation3 + $0x39]]
    %s72 = sld [smem:[#allocation3 + $0x3a]]
    %s73 = sld [smem:[#allocation3 + $0x3b]]
    %s74 = sld [smem:[#allocation3 + $0x3c]]
    %v75 = vld [vmem:[%s1] sm:$0x1]
    %v76 = vstv %s14
    %v77 = vmul.f32 %v75, %v76
    %v78 = vstv %s34
    %v79 = vadd.f32 %v77, %v78
    %v80 = vmax.f32 %v79, 0.0
    %v81 = vstv %s54
    %v82 = vmul.f32 %v81, %v80
    %v83 = vstv %s15
    %v84 = vmul.f32 %v75, %v83
    %v85 = vstv %s35
    %v86 = vadd.f32 %v84, %v85
    %v87 = vmax.f32 %v86, 0.0
    %v88 = vstv %s55
    %v89 = vmul.f32 %v88, %v87
    %v90 = vadd.f32 %v82, %v89
    %v91 = vstv %s16
    %v92 = vmul.f32 %v75, %v91
    %v93 = vstv %s36
    %v94 = vadd.f32 %v92, %v93
    %v95 = vmax.f32 %v94, 0.0
    %v96 = vstv %s56
    %v97 = vmul.f32 %v96, %v95
    %v98 = vadd.f32 %v90, %v97
    %v99 = vstv %s17
    %v100 = vmul.f32 %v75, %v99
    %v101 = vstv %s37
    %v102 = vadd.f32 %v100, %v101
    %v103 = vmax.f32 %v102, 0.0
    %v104 = vstv %s57
    %v105 = vmul.f32 %v104, %v103
    %v106 = vadd.f32 %v98, %v105
    %v107 = vstv %s18
    %v108 = vmul.f32 %v75, %v107
    %v109 = vstv %s38
    %v110 = vadd.f32 %v108, %v109
    %v111 = vmax.f32 %v110, 0.0
    %v112 = vstv %s58
    %v113 = vmul.f32 %v112, %v111
    %v114 = vadd.f32 %v106, %v113
    %v115 = vstv %s19
    %v116 = vmul.f32 %v75, %v115
    %v117 = vstv %s39
    %v118 = vadd.f32 %v116, %v117
    %v119 = vmax.f32 %v118, 0.0
    %v120 = vstv %s59
    %v121 = vmul.f32 %v120, %v119
    %v122 = vadd.f32 %v114, %v121
    %v123 = vstv %s20
    %v124 = vmul.f32 %v75, %v123
    %v125 = vstv %s40
    %v126 = vadd.f32 %v124, %v125
    %v127 = vmax.f32 %v126, 0.0
    %v128 = vstv %s60
    %v129 = vmul.f32 %v128, %v127
    %v130 = vadd.f32 %v122, %v129
    %v131 = vstv %s21
    %v132 = vmul.f32 %v75, %v131
    %v133 = vstv %s41
    %v134 = vadd.f32 %v132, %v133
    %v135 = vmax.f32 %v134, 0.0
    %v136 = vstv %s61
    %v137 = vmul.f32 %v136, %v135
    %v138 = vadd.f32 %v130, %v137
    %v139 = vstv %s22
    %v140 = vmul.f32 %v75, %v139
    %v141 = vstv %s42
    %v142 = vadd.f32 %v140, %v141
    %v143 = vmax.f32 %v142, 0.0
    %v144 = vstv %s62
    %v145 = vmul.f32 %v144, %v143
    %v146 = vadd.f32 %v138, %v145
    %v147 = vstv %s23
    %v148 = vmul.f32 %v75, %v147
    %v149 = vstv %s43
    %v150 = vadd.f32 %v148, %v149
    %v151 = vmax.f32 %v150, 0.0
    %v152 = vstv %s63
    %v153 = vmul.f32 %v152, %v151
    %v154 = vadd.f32 %v146, %v153
    %v155 = vstv %s24
    %v156 = vmul.f32 %v75, %v155
    %v157 = vstv %s44
    %v158 = vadd.f32 %v156, %v157
    %v159 = vmax.f32 %v158, 0.0
    %v160 = vstv %s64
    %v161 = vmul.f32 %v160, %v159
    %v162 = vadd.f32 %v154, %v161
    %v163 = vstv %s25
    %v164 = vmul.f32 %v75, %v163
    %v165 = vstv %s45
    %v166 = vadd.f32 %v164, %v165
    %v167 = vmax.f32 %v166, 0.0
    %v168 = vstv %s65
    %v169 = vmul.f32 %v168, %v167
    %v170 = vadd.f32 %v162, %v169
    %v171 = vstv %s26
    %v172 = vmul.f32 %v75, %v171
    %v173 = vstv %s46
    %v174 = vadd.f32 %v172, %v173
    %v175 = vmax.f32 %v174, 0.0
    %v176 = vstv %s66
    %v177 = vmul.f32 %v176, %v175
    %v178 = vadd.f32 %v170, %v177
    %v179 = vstv %s27
    %v180 = vmul.f32 %v75, %v179
    %v181 = vstv %s47
    %v182 = vadd.f32 %v180, %v181
    %v183 = vmax.f32 %v182, 0.0
    %v184 = vstv %s67
    %v185 = vmul.f32 %v184, %v183
    %v186 = vadd.f32 %v178, %v185
    %v187 = vstv %s28
    %v188 = vmul.f32 %v75, %v187
    %v189 = vstv %s48
    %v190 = vadd.f32 %v188, %v189
    %v191 = vmax.f32 %v190, 0.0
    %v192 = vstv %s68
    %v193 = vmul.f32 %v192, %v191
    %v194 = vadd.f32 %v186, %v193
    %v195 = vstv %s29
    %v196 = vmul.f32 %v75, %v195
    %v197 = vstv %s49
    %v198 = vadd.f32 %v196, %v197
    %v199 = vmax.f32 %v198, 0.0
    %v200 = vstv %s69
    %v201 = vmul.f32 %v200, %v199
    %v202 = vadd.f32 %v194, %v201
    %v203 = vstv %s30
    %v204 = vmul.f32 %v75, %v203
    %v205 = vstv %s50
    %v206 = vadd.f32 %v204, %v205
    %v207 = vmax.f32 %v206, 0.0
    %v208 = vstv %s70
    %v209 = vmul.f32 %v208, %v207
    %v210 = vadd.f32 %v202, %v209
    %v211 = vstv %s31
    %v212 = vmul.f32 %v75, %v211
    %v213 = vstv %s51
    %v214 = vadd.f32 %v212, %v213
    %v215 = vmax.f32 %v214, 0.0
    %v216 = vstv %s71
    %v217 = vmul.f32 %v216, %v215
    %v218 = vadd.f32 %v210, %v217
    %v219 = vstv %s32
    %v220 = vmul.f32 %v75, %v219
    %v221 = vstv %s52
    %v222 = vadd.f32 %v220, %v221
    %v223 = vmax.f32 %v222, 0.0
    %v224 = vstv %s72
    %v225 = vmul.f32 %v224, %v223
    %v226 = vadd.f32 %v218, %v225
    %v227 = vstv %s33
    %v228 = vmul.f32 %v75, %v227
    %v229 = vstv %s53
    %v230 = vadd.f32 %v228, %v229
    %v231 = vmax.f32 %v230, 0.0
    %v232 = vstv %s73
    %v233 = vmul.f32 %v232, %v231
    %v234 = vadd.f32 %v226, %v233
    %v235 = vstv %s74
    %v236 = vadd.f32 %v234, %v235
    %237 = vst [vmem:[#allocation4] sm:$0x1] %v236
    // Predicated region
    $region6: #{tpu_custom_call.1} parent=1 // pred_check
      _
    $region7: #{tpu_custom_call.1} parent=1 // pred_check_branch
      %239 = sbr.rel (0) target = $region9
    $region8: #{tpu_custom_call.1} parent=1 // pred_region
      %s241 = ssub.s32 16, 16
      %242 = vsyncadd [#allocation5], %s241
      %s244 = sshll.u32 [#allocation4], 4
      %s245 = int_to_ptr.vmem [resolvable:$true] %s244
      %247 = dma.vmem_to_hbm [thread:$0]  %s245, 16, %s2, [#allocation5]
    $region9: #{tpu_custom_call.1} parent=1 // pred_fallthru
      _
    // Predicated region
    $region10: #{tpu_custom_call.1} parent=1 // pred_check
      _
    $region11: #{tpu_custom_call.1} parent=1 // pred_check_branch
      %249 = sbr.rel (0) target = $region13
    $region12: #{tpu_custom_call.1} parent=1 // pred_region
      %250 = dma.done [#allocation5], 16
    $region13: #{tpu_custom_call.1} parent=1 // pred_fallthru
      _
    %251 = vsyncpa [#allocation5], 1

</llo_original>
